<compile_context>
chip_gen: v7x
topology: tpu7x:2x2x1
jax: 0.10.0
libtpu: 0.0.40
codegen_flags: <defaults>
</compile_context>

<pallas_src>
import jax
import jax.numpy as jnp
from jax.experimental import pallas as pl
from jax.experimental.pallas import tpu as pltpu


def _round_up(a: int, b: int) -> int:
    return ((a + b - 1) // b) * b


def _chip_vmem_cap_bytes() -> int:
    """Physical VMEM capacity; conservative fallback (v7x = 64 MiB) if unknown."""
    try:
        return int(pltpu.get_tpu_info().vmem_capacity_bytes)
    except Exception:
        return 64 * 1024 * 1024


def _linear_classifier_kernel(x_ref, gamma_ref, beta_ref, w_ref, b_ref, o_ref):
    # x_ref:     (TB, D)    flattened input tile (streamed)
    # gamma_ref: (1, D)     LayerNorm weight      (resident, constant index_map)
    # beta_ref:  (1, D)     LayerNorm bias        (resident)
    # w_ref:     (D, NCp)   Linear weight, pre-transposed, NC lane-padded (resident)
    # b_ref:     (1, NCp)   Linear bias, NC lane-padded (resident)
    # o_ref:     (TB, NCp)  logits tile (lane-dense, unmasked stores)
    x = x_ref[...]

    # LayerNorm over last dim (biased variance, eps=1e-5, like nn.LayerNorm), f32.
    mean = jnp.mean(x, axis=-1, keepdims=True)
    xc = x - mean
    var = jnp.mean(xc * xc, axis=-1, keepdims=True)
    inv = jax.lax.rsqrt(var + 1e-5)
    xn = xc * inv * gamma_ref[...] + beta_ref[...]

    # Linear: standard (TB,D) x (D,NCp) matmul -> MXU consumes weight directly.
    w = w_ref[...]
    logits = jnp.dot(xn.astype(w.dtype), w, preferred_element_type=jnp.float32)
    o_ref[...] = (logits + b_ref[...].astype(jnp.float32)).astype(o_ref.dtype)


def prepare_params(gamma, beta, weight, bias, *, lane: int = 128,
                   weight_dtype=jnp.float32):
    """One-time (out of hot path) parameter layout prep.

    weight: (NC, D) as in nn.Linear. Transposed to (D, NCp) with NC zero-padded to
    a multiple of `lane` so the kernel output is lane-dense and the MXU needs no
    per-tile weight re-layout. Exact (padded columns are zero; bias padded with 0).
    weight_dtype=jnp.bfloat16 enables the optional reduced-precision path (v5e win).
    NOTE: lane=256 may be worth sweeping on v6e/v7x (256-wide MXU N dim).
    """
    D = gamma.shape[0]
    NC, Dw = weight.shape
    assert Dw == D
    NCp = _round_up(max(NC, 1), lane)
    w_t = jnp.zeros((D, NCp), weight_dtype).at[:, :NC].set(
        weight.T.astype(weight_dtype))
    b_pad = jnp.zeros((1, NCp), jnp.float32).at[0, :NC].set(
        bias.astype(jnp.float32))
    gamma2d = gamma.reshape(1, D).astype(jnp.float32)
    beta2d = beta.reshape(1, D).astype(jnp.float32)
    return gamma2d, beta2d, w_t, b_pad


def linear_classifier_forward(x, gamma2d, beta2d, w_t, b_pad, num_classes,
                              *, max_tb: int = 512):
    """x: (B, C, H, W) float32.  Returns logits (B, num_classes) float32."""
    B = x.shape[0]
    D = gamma2d.shape[1]
    NCp = w_t.shape[1]

    x2d = x.reshape(B, D)  # nn.Flatten (row-major, matches torch)

    # Tiny-batch safeguard only: pad up to one sublane tile (8 rows). For B >= 8 we
    # stream x unpadded and let Pallas mask the ragged tail tile (no extra HBM copy).
    if B < 8:
        x2d = jnp.zeros((8, D), x2d.dtype).at[:B, :].set(x2d)
    Brows = x2d.shape[0]

    # Batch tile: multiple of 8, capped by max_tb, and >= 2 tiles when the batch
    # allows it so the "parallel" grid axis can shard across v7x's 2 TensorCores.
    if Brows <= 8:
        TB = 8
    else:
        TB = min(max_tb, _round_up((Brows + 1) // 2, 8))
        TB = max(TB, 8)

    # Chip-aware VMEM budget (v7x: 64 MiB physical). Every in_spec is
    # double-buffered by default, including the resident weight/params; also
    # account for LayerNorm / matmul temporaries, then shrink TB if needed.
    w_bytes = w_t.size * jnp.dtype(w_t.dtype).itemsize
    budget_cap = int(_chip_vmem_cap_bytes() * 0.75)

    def residency(tb):
        return (2 * tb * D * 4            # double-buffered x tiles
                + 2 * tb * NCp * 4        # double-buffered out tiles
                + 2 * w_bytes             # weight (double-buffered even if resident)
                + 2 * (2 * D * 4 + NCp * 4)   # gamma/beta/bias (double-buffered)
                + 3 * tb * D * 4 + tb * NCp * 4  # xc/xn/logits temporaries
                + (4 << 20))              # compiler scratch headroom

    while residency(TB) > budget_cap and TB > 8:
        TB = max(8, _round_up(TB // 2, 8))
    vmem_limit = min(budget_cap, residency(TB))

    num_tiles = pl.cdiv(Brows, TB)
    out_rows = num_tiles * TB  # output row-padded -> full unmasked output stores

    cost = pl.CostEstimate(
        flops=2 * Brows * D * NCp + 8 * Brows * D,
        transcendentals=Brows,                       # one rsqrt per row
        bytes_accessed=Brows * D * 4 + w_bytes + out_rows * NCp * 4,
    )

    out = pl.pallas_call(
        _linear_classifier_kernel,
        out_shape=jax.ShapeDtypeStruct((out_rows, NCp), jnp.float32),
        grid_spec=pltpu.PrefetchScalarGridSpec(
            num_scalar_prefetch=0,
            grid=(num_tiles,),
            in_specs=[
                pl.BlockSpec((TB, D), lambda i: (i, 0)),    # streamed x tiles
                pl.BlockSpec((1, D), lambda i: (0, 0)),     # gamma (resident)
                pl.BlockSpec((1, D), lambda i: (0, 0)),     # beta  (resident)
                pl.BlockSpec((D, NCp), lambda i: (0, 0)),   # weight^T (resident)
                pl.BlockSpec((1, NCp), lambda i: (0, 0)),   # bias  (resident)
            ],
            out_specs=pl.BlockSpec((TB, NCp), lambda i: (i, 0)),
        ),
        compiler_params=pltpu.CompilerParams(
            dimension_semantics=("parallel",),   # batch tiles are independent
            vmem_limit_bytes=int(vmem_limit),
        ),
        cost_estimate=cost,
    )(x2d, gamma2d, beta2d, w_t, b_pad)

    return out[:B, :num_classes]


if __name__ == "__main__":
    # Small shapes consistent with the module: batch=2, channels=4, spatial=16
    B, C, H, W = 2, 4, 16, 16
    D = C * H * W                 # input_dim = 1024
    NC = 10                       # num_classes

    key = jax.random.PRNGKey(0)
    kx, kw, kb = jax.random.split(key, 3)

    x = jax.random.normal(kx, (B, C, H, W), dtype=jnp.float32)

    # LayerNorm params: torch default init (weight=1, bias=0)
    gamma = jnp.ones((D,), dtype=jnp.float32)
    beta = jnp.zeros((D,), dtype=jnp.float32)

    # Linear params: deterministic uniform init in [-1/sqrt(D), 1/sqrt(D)]
    bound = 1.0 / (D ** 0.5)
    weight = jax.random.uniform(kw, (NC, D), minval=-bound, maxval=bound,
                                dtype=jnp.float32)
    bias = jax.random.uniform(kb, (NC,), minval=-bound, maxval=bound,
                              dtype=jnp.float32)

    # One-time parameter prep (outside the hot path).
    gamma2d, beta2d, w_t, b_pad = prepare_params(gamma, beta, weight, bias)

    out = linear_classifier_forward(x, gamma2d, beta2d, w_t, b_pad, NC)
    out = jax.block_until_ready(out)

    # Pure-JAX reference check
    x2d = x.reshape(B, D)
    mean = jnp.mean(x2d, axis=-1, keepdims=True)
    var = jnp.mean((x2d - mean) ** 2, axis=-1, keepdims=True)
    xn = (x2d - mean) / jnp.sqrt(var + 1e-5) * gamma + beta
    ref = xn @ weight.T + bias

    assert out.shape == (B, NC)
    assert jnp.allclose(out, ref, atol=1e-4, rtol=1e-4)

    print("KERNEL_OK")
</pallas_src>

<mosaic_0001>
module attributes {stable_mosaic.version = 11 : i64} {
  func.func @_linear_classifier_kernel(%arg0: i32, %arg1: memref<8x1024xf32, #tpu.memory_space<vmem>>, %arg2: memref<1x1024xf32, #tpu.memory_space<vmem>>, %arg3: memref<1x1024xf32, #tpu.memory_space<vmem>>, %arg4: memref<1024x128xf32, #tpu.memory_space<vmem>>, %arg5: memref<1x128xf32, #tpu.memory_space<vmem>>, %arg6: memref<8x128xf32, #tpu.memory_space<vmem>>) attributes {dimension_semantics = [#tpu.dimension_semantics<parallel>], iteration_bounds = array<i64: 1>, scalar_prefetch = 0 : i64, scratch_operands = 0 : i64, tpu.core_type = #tpu.core_type<tc>, window_params = [{transform_indices = @transform_0, window_bounds = array<i64: 8, 1024>}, {pipeline_mode = #tpu.pipeline_mode<synchronous>, transform_indices = @transform_1, window_bounds = array<i64: 1, 1024>}, {pipeline_mode = #tpu.pipeline_mode<synchronous>, transform_indices = @transform_2, window_bounds = array<i64: 1, 1024>}, {pipeline_mode = #tpu.pipeline_mode<synchronous>, transform_indices = @transform_3, window_bounds = array<i64: 1024, 128>}, {pipeline_mode = #tpu.pipeline_mode<synchronous>, transform_indices = @transform_4, window_bounds = array<i64: 1, 128>}, {transform_indices = @transform_5, window_bounds = array<i64: 8, 128>}]} {
    %c0 = arith.constant 0 : index
    %c0_0 = arith.constant 0 : index
    %0 = vector.load %arg1[%c0, %c0_0] : memref<8x1024xf32, #tpu.memory_space<vmem>>, vector<8x1024xf32>
    %cst = arith.constant dense<0.000000e+00> : vector<8xf32>
    %1 = vector.multi_reduction <add>, %0, %cst [1] : vector<8x1024xf32> to vector<8xf32>
    %2 = vector.shape_cast %1 : vector<8xf32> to vector<8x1xf32>
    %cst_1 = arith.constant 1.024000e+03 : f32
    %3 = vector.broadcast %cst_1 : f32 to vector<8x1xf32>
    %4 = arith.divf %2, %3 : vector<8x1xf32>
    %5 = vector.broadcast %4 : vector<8x1xf32> to vector<8x1024xf32>
    %6 = arith.subf %0, %5 : vector<8x1024xf32>
    %7 = arith.mulf %6, %6 : vector<8x1024xf32>
    %cst_2 = arith.constant dense<0.000000e+00> : vector<8xf32>
    %8 = vector.multi_reduction <add>, %7, %cst_2 [1] : vector<8x1024xf32> to vector<8xf32>
    %9 = vector.shape_cast %8 : vector<8xf32> to vector<8x1xf32>
    %cst_3 = arith.constant 1.024000e+03 : f32
    %10 = vector.broadcast %cst_3 : f32 to vector<8x1xf32>
    %11 = arith.divf %9, %10 : vector<8x1xf32>
    %cst_4 = arith.constant 9.99999974E-6 : f32
    %12 = vector.broadcast %cst_4 : f32 to vector<8x1xf32>
    %13 = arith.addf %11, %12 : vector<8x1xf32>
    %14 = math.rsqrt %13 : vector<8x1xf32>
    %15 = vector.broadcast %14 : vector<8x1xf32> to vector<8x1024xf32>
    %16 = arith.mulf %6, %15 : vector<8x1024xf32>
    %c0_5 = arith.constant 0 : index
    %c0_6 = arith.constant 0 : index
    %17 = vector.load %arg2[%c0_5, %c0_6] : memref<1x1024xf32, #tpu.memory_space<vmem>>, vector<1x1024xf32>
    %18 = vector.broadcast %17 : vector<1x1024xf32> to vector<8x1024xf32>
    %19 = arith.mulf %16, %18 : vector<8x1024xf32>
    %c0_7 = arith.constant 0 : index
    %c0_8 = arith.constant 0 : index
    %20 = vector.load %arg3[%c0_7, %c0_8] : memref<1x1024xf32, #tpu.memory_space<vmem>>, vector<1x1024xf32>
    %21 = vector.broadcast %20 : vector<1x1024xf32> to vector<8x1024xf32>
    %22 = arith.addf %19, %21 : vector<8x1024xf32>
    %c0_9 = arith.constant 0 : index
    %c0_10 = arith.constant 0 : index
    %23 = vector.load %arg4[%c0_9, %c0_10] : memref<1024x128xf32, #tpu.memory_space<vmem>>, vector<1024x128xf32>
    %cst_11 = arith.constant dense<0.000000e+00> : vector<8x128xf32>
    %24 = tpu.matmul %22, %23, %cst_11 {dimension_numbers = #tpu.dot_dimension_numbers<[1], [0], [0], [1], [0, 0, 1, 1], [], []>} : vector<8x1024xf32>, vector<1024x128xf32>, vector<8x128xf32> -> vector<8x128xf32>
    %c0_12 = arith.constant 0 : index
    %c0_13 = arith.constant 0 : index
    %25 = vector.load %arg5[%c0_12, %c0_13] : memref<1x128xf32, #tpu.memory_space<vmem>>, vector<1x128xf32>
    %26 = vector.broadcast %25 : vector<1x128xf32> to vector<8x128xf32>
    %27 = arith.addf %24, %26 : vector<8x128xf32>
    %c0_14 = arith.constant 0 : index
    %c0_15 = arith.constant 0 : index
    %28 = vector.load %arg6[%c0_14, %c0_15] : memref<8x128xf32, #tpu.memory_space<vmem>>, vector<8x128xf32>
    tpu.vector_store %arg6[%c0_14, %c0_15], %27 {strides = array<i32>} : memref<8x128xf32, #tpu.memory_space<vmem>>, vector<8x128xf32>,
    return
  }
  func.func @transform_0(%arg0: i32) -> (i32, i32) {
    %c0_i32 = arith.constant 0 : i32
    %c0_i32_0 = arith.constant 0 : i32
    return %arg0, %c0_i32 : i32, i32
  }
  func.func @transform_1(%arg0: i32) -> (i32, i32) {
    %c0_i32 = arith.constant 0 : i32
    %c0_i32_0 = arith.constant 0 : i32
    %c0_i32_1 = arith.constant 0 : i32
    return %c0_i32, %c0_i32_0 : i32, i32
  }
  func.func @transform_2(%arg0: i32) -> (i32, i32) {
    %c0_i32 = arith.constant 0 : i32
    %c0_i32_0 = arith.constant 0 : i32
    %c0_i32_1 = arith.constant 0 : i32
    return %c0_i32, %c0_i32_0 : i32, i32
  }
  func.func @transform_3(%arg0: i32) -> (i32, i32) {
    %c0_i32 = arith.constant 0 : i32
    %c0_i32_0 = arith.constant 0 : i32
    %c0_i32_1 = arith.constant 0 : i32
    return %c0_i32, %c0_i32_0 : i32, i32
  }
  func.func @transform_4(%arg0: i32) -> (i32, i32) {
    %c0_i32 = arith.constant 0 : i32
    %c0_i32_0 = arith.constant 0 : i32
    %c0_i32_1 = arith.constant 0 : i32
    return %c0_i32, %c0_i32_0 : i32, i32
  }
  func.func @transform_5(%arg0: i32) -> (i32, i32) {
    %c0_i32 = arith.constant 0 : i32
    %c0_i32_0 = arith.constant 0 : i32
    return %arg0, %c0_i32 : i32, i32
  }
}

</mosaic_0001>

<llo_original>
// kernel: tpu_custom_call.1
$region0: #{tpu_custom_call.1}
  #allocation0 [shape = 'u32[]', space=smem, size = 0x4, offset = 0x4, fixed_abs, tag = 'smem constant byte address 0x4 - core index']
  #allocation1 [shape = 'u32[144,128]{1,0:T(1,128)}', space=vmem, size = 0x12000, scoped, tag = 'internal scratch']
  %s0 = inlined_call_operand.hbm [shape: f32[8,1024], index: 0, kind: input, shape index: {}]
  %s1 = inlined_call_operand.hbm [shape: f32[1,1024], index: 1, kind: input, shape index: {}]
  %s2 = inlined_call_operand.hbm [shape: f32[1,1024], index: 2, kind: input, shape index: {}]
  %s3 = inlined_call_operand.hbm [shape: f32[1024,128], index: 3, kind: input, shape index: {}]
  %s4 = inlined_call_operand.vmem [shape: f32[1,128], index: 4, kind: input, shape index: {}]
  %s5 = inlined_call_operand.hbm [shape: f32[8,128], index: 5, kind: output, shape index: {}]
  %s6 = sld [smem:[#allocation0]]
  $region46: #{tpu_custom_call.1} parent=0
    _
  %s8 = ssub.s32 1, %s6
  %s9 = scalar_select 0, %s8, %s6
  $region1: #{tpu_custom_call.1} parent=0
    #allocation2 [shape = 'u8[32768]{0}', space=vmem, size = 0x8000, scoped, tag = 'input window, operand 0, single buffered']
    #allocation3 [shape = 's32[1]{0}', space=sflag, size = 0x4, scoped, tag = 'scoped memory for tpu_custom_call.1']
    #allocation4 [shape = 's32[1]{0}', space=sflag, size = 0x4, scoped, tag = 'scoped memory for tpu_custom_call.1']
    #allocation5 [shape = 'u8[4096]{0}', space=vmem, size = 0x1000, scoped, tag = 'input window, operand 1, single buffered']
    #allocation6 [shape = 's32[1]{0}', space=sflag, size = 0x4, scoped, tag = 'scoped memory for tpu_custom_call.1']
    #allocation7 [shape = 'u8[4096]{0}', space=vmem, size = 0x1000, scoped, tag = 'input window, operand 2, single buffered']
    #allocation8 [shape = 'u8[524288]{0}', space=vmem, size = 0x80000, scoped, tag = 'input window, operand 3, single buffered']
    #allocation9 [shape = 's32[1]{0}', space=sflag, size = 0x4, scoped, tag = 'scoped memory for tpu_custom_call.1']
    #allocation10 [shape = 'u8[4096]{0}', space=vmem, size = 0x1000, scoped, tag = 'output window, operand 0, single buffered']
    %10 = vsyncpa [#allocation3], 0
    %11 = vsyncpa [#allocation6], 0
    %12 = vsyncpa [#allocation9], 0
    %13 = vsyncpa [#allocation4], 0
    // Predicated region
    $region2: #{tpu_custom_call.1} parent=1 // pred_check
      _
    $region3: #{tpu_custom_call.1} parent=1 // pred_check_branch
      %15 = sbr.rel (0) target = $region5
    $region4: #{tpu_custom_call.1} parent=1 // pred_region
      %s17 = ssub.s32 1024, 1024
      %18 = vsyncadd [#allocation3], %s17
      %s20 = sshll.u32 [#allocation2], 4
      %s21 = int_to_ptr.vmem [resolvable:$true] %s20
      %23 = dma.hbm_to_vmem [thread:$0]  %s0, 1024, %s21, [#allocation3]
    $region5: #{tpu_custom_call.1} parent=1 // pred_fallthru
      _
    // Predicated region
    $region6: #{tpu_custom_call.1} parent=1 // pred_check
      _
    $region7: #{tpu_custom_call.1} parent=1 // pred_check_branch
      %25 = sbr.rel (0) target = $region9
    $region8: #{tpu_custom_call.1} parent=1 // pred_region
      %s27 = ssub.s32 128, 128
      %28 = vsyncadd [#allocation6], %s27
      %s30 = sshll.u32 [#allocation5], 4
      %s31 = int_to_ptr.vmem [resolvable:$true] %s30
      %33 = dma.hbm_to_vmem [thread:$0]  %s1, 128, %s31, [#allocation6]
    $region9: #{tpu_custom_call.1} parent=1 // pred_fallthru
      _
    // Predicated region
    $region10: #{tpu_custom_call.1} parent=1 // pred_check
      _
    $region11: #{tpu_custom_call.1} parent=1 // pred_check_branch
      %35 = sbr.rel (0) target = $region13
    $region12: #{tpu_custom_call.1} parent=1 // pred_region
      %s37 = ssub.s32 128, 128
      %38 = vsyncadd [#allocation6], %s37
      %s40 = sshll.u32 [#allocation7], 4
      %s41 = int_to_ptr.vmem [resolvable:$true] %s40
      %43 = dma.hbm_to_vmem [thread:$0]  %s2, 128, %s41, [#allocation6]
    $region13: #{tpu_custom_call.1} parent=1 // pred_fallthru
      _
    // Predicated region
    $region14: #{tpu_custom_call.1} parent=1 // pred_check
      _
    $region15: #{tpu_custom_call.1} parent=1 // pred_check_branch
      %45 = sbr.rel (0) target = $region17
    $region16: #{tpu_custom_call.1} parent=1 // pred_region
      %s47 = ssub.s32 16384, 16384
      %48 = vsyncadd [#allocation9], %s47
      %s49 = sshll.u32 [#allocation8], 4
      %s50 = int_to_ptr.vmem [resolvable:$true] %s49
      %55 = dma.hbm_to_vmem [thread:$0]  %s3, 16384, %s50, [#allocation9], 128, 128, 8
    $region17: #{tpu_custom_call.1} parent=1 // pred_fallthru
      _
    // Predicated region
    $region18: #{tpu_custom_call.1} parent=1 // pred_check
      _
    $region19: #{tpu_custom_call.1} parent=1 // pred_check_branch
      %57 = sbr.rel (0) target = $region21
    $region20: #{tpu_custom_call.1} parent=1 // pred_region
      _
    $region21: #{tpu_custom_call.1} parent=1 // pred_fallthru
      _
    // Predicated region
    $region22: #{tpu_custom_call.1} parent=1 // pred_check
      _
    $region23: #{tpu_custom_call.1} parent=1 // pred_check_branch
      %59 = sbr.rel (0) target = $region25
    $region24: #{tpu_custom_call.1} parent=1 // pred_region
      %60 = dma.done [#allocation3], 1024
    $region25: #{tpu_custom_call.1} parent=1 // pred_fallthru
      _
    // Predicated region
    $region26: #{tpu_custom_call.1} parent=1 // pred_check
      _
    $region27: #{tpu_custom_call.1} parent=1 // pred_check_branch
      %62 = sbr.rel (0) target = $region29
    $region28: #{tpu_custom_call.1} parent=1 // pred_region
      %63 = dma.done [#allocation6], 128
    $region29: #{tpu_custom_call.1} parent=1 // pred_fallthru
      _
    // Predicated region
    $region30: #{tpu_custom_call.1} parent=1 // pred_check
      _
    $region31: #{tpu_custom_call.1} parent=1 // pred_check_branch
      %65 = sbr.rel (0) target = $region33
    $region32: #{tpu_custom_call.1} parent=1 // pred_region
      %66 = dma.done [#allocation6], 128
    $region33: #{tpu_custom_call.1} parent=1 // pred_fallthru
      _
    // Predicated region
    $region34: #{tpu_custom_call.1} parent=1 // pred_check
      _
    $region35: #{tpu_custom_call.1} parent=1 // pred_check_branch
      %68 = sbr.rel (0) target = $region37
    $region36: #{tpu_custom_call.1} parent=1 // pred_region
      %69 = dma.done [#allocation9], 16384
    $region37: #{tpu_custom_call.1} parent=1 // pred_fallthru
      _
    %v70 = vld [vmem:[#allocation2] sm:$0xff]
    %v71 = vld [vmem:[#allocation2 + $0x8] sm:$0xff]
    %v72 = vld [vmem:[#allocation2 + $0x10] sm:$0xff]
    %v73 = vld [vmem:[#allocation2 + $0x18] sm:$0xff]
    %v74 = vld [vmem:[#allocation2 + $0x20] sm:$0xff]
    %v75 = vld [vmem:[#allocation2 + $0x28] sm:$0xff]
    %v76 = vld [vmem:[#allocation2 + $0x30] sm:$0xff]
    %v77 = vld [vmem:[#allocation2 + $0x38] sm:$0xff]
    %v78 = vadd.f32 %v70, %v71
    %v79 = vadd.f32 %v78, %v72
    %v80 = vadd.f32 %v79, %v73
    %v81 = vadd.f32 %v80, %v74
    %v82 = vadd.f32 %v81, %v75
    %v83 = vadd.f32 %v82, %v76
    %v84 = vadd.f32 %v83, %v77
    %85 = vadd.xlane.f32.xlu0 %v84
    %v86 = vpop.xlane.xlu0 %85
    %v87 = vrcp.pop 1024.0
    %v88 = vmul.f32 %v86, %v87
    %v89 = vsub.f32 %v70, %v88
    %v90 = vsub.f32 %v71, %v88
    %v91 = vsub.f32 %v72, %v88
    %v92 = vsub.f32 %v73, %v88
    %v93 = vsub.f32 %v74, %v88
    %v94 = vsub.f32 %v75, %v88
    %v95 = vsub.f32 %v76, %v88
    %v96 = vsub.f32 %v77, %v88
    %v97 = vmul.f32 %v89, %v89
    %v98 = vmul.f32 %v90, %v90
    %v99 = vmul.f32 %v91, %v91
    %v100 = vmul.f32 %v92, %v92
    %v101 = vmul.f32 %v93, %v93
    %v102 = vmul.f32 %v94, %v94
    %v103 = vmul.f32 %v95, %v95
    %v104 = vmul.f32 %v96, %v96
    %v105 = vadd.f32 %v97, %v98
    %v106 = vadd.f32 %v105, %v99
    %v107 = vadd.f32 %v106, %v100
    %v108 = vadd.f32 %v107, %v101
    %v109 = vadd.f32 %v108, %v102
    %v110 = vadd.f32 %v109, %v103
    %v111 = vadd.f32 %v110, %v104
    %112 = vadd.xlane.f32.xlu0 %v111
    %v113 = vpop.xlane.xlu0 %112
    %v114 = vmul.f32 %v113, %v87
    %v115 = vadd.f32 %v114, 1e-05
    %v116 = vrsqrt.pop %v115
    %v117 = vmul.f32 %v89, %v116
    %v118 = vmul.f32 %v90, %v116
    %v119 = vmul.f32 %v91, %v116
    %v120 = vmul.f32 %v92, %v116
    %v121 = vmul.f32 %v93, %v116
    %v122 = vmul.f32 %v94, %v116
    %v123 = vmul.f32 %v95, %v116
    %v124 = vmul.f32 %v96, %v116
    %v125 = vld [vmem:[#allocation5] sm:$0xff]
    %v127 = vlaneseq
    %v128 = vshrl.u32 %v127, 7
    %v129 = vsub.s32 0, %v128
    %v130 = vrot.slane %v125, %v129
    %v131 = vlaneseq
    %v132 = vshrl.u32 %v131, 7
    %v133 = vsub.s32 1, %v132
    %v134 = vrot.slane %v125, %v133
    %v135 = vlaneseq
    %v136 = vshrl.u32 %v135, 7
    %v137 = vsub.s32 2, %v136
    %v138 = vrot.slane %v125, %v137
    %v139 = vlaneseq
    %v140 = vshrl.u32 %v139, 7
    %v141 = vsub.s32 3, %v140
    %v142 = vrot.slane %v125, %v141
    %v143 = vlaneseq
    %v144 = vshrl.u32 %v143, 7
    %v145 = vsub.s32 4, %v144
    %v146 = vrot.slane %v125, %v145
    %v147 = vlaneseq
    %v148 = vshrl.u32 %v147, 7
    %v149 = vsub.s32 5, %v148
    %v150 = vrot.slane %v125, %v149
    %v151 = vlaneseq
    %v152 = vshrl.u32 %v151, 7
    %v153 = vsub.s32 6, %v152
    %v154 = vrot.slane %v125, %v153
    %v155 = vlaneseq
    %v156 = vshrl.u32 %v155, 7
    %v157 = vsub.s32 7, %v156
    %v158 = vrot.slane %v125, %v157
    %v167 = vmul.f32 %v117, %v130
    %v168 = vmul.f32 %v118, %v134
    %v169 = vmul.f32 %v119, %v138
    %v170 = vmul.f32 %v120, %v142
    %v171 = vmul.f32 %v121, %v146
    %v172 = vmul.f32 %v122, %v150
    %v173 = vmul.f32 %v123, %v154
    %v174 = vmul.f32 %v124, %v158
    %v175 = vld [vmem:[#allocation7] sm:$0xff]
    %v177 = vlaneseq
    %v178 = vshrl.u32 %v177, 7
    %v179 = vsub.s32 0, %v178
    %v180 = vrot.slane %v175, %v179
    %v181 = vlaneseq
    %v182 = vshrl.u32 %v181, 7
    %v183 = vsub.s32 1, %v182
    %v184 = vrot.slane %v175, %v183
    %v185 = vlaneseq
    %v186 = vshrl.u32 %v185, 7
    %v187 = vsub.s32 2, %v186
    %v188 = vrot.slane %v175, %v187
    %v189 = vlaneseq
    %v190 = vshrl.u32 %v189, 7
    %v191 = vsub.s32 3, %v190
    %v192 = vrot.slane %v175, %v191
    %v193 = vlaneseq
    %v194 = vshrl.u32 %v193, 7
    %v195 = vsub.s32 4, %v194
    %v196 = vrot.slane %v175, %v195
    %v197 = vlaneseq
    %v198 = vshrl.u32 %v197, 7
    %v199 = vsub.s32 5, %v198
    %v200 = vrot.slane %v175, %v199
    %v201 = vlaneseq
    %v202 = vshrl.u32 %v201, 7
    %v203 = vsub.s32 6, %v202
    %v204 = vrot.slane %v175, %v203
    %v205 = vlaneseq
    %v206 = vshrl.u32 %v205, 7
    %v207 = vsub.s32 7, %v206
    %v208 = vrot.slane %v175, %v207
    %v217 = vadd.f32 %v167, %v180
    %v218 = vadd.f32 %v168, %v184
    %v219 = vadd.f32 %v169, %v188
    %v220 = vadd.f32 %v170, %v192
    %v221 = vadd.f32 %v171, %v196
    %v222 = vadd.f32 %v172, %v200
    %v223 = vadd.f32 %v173, %v204
    %v224 = vadd.f32 %v174, %v208
    %v225 = vld [vmem:[#allocation8] sm:$0xff]
    %v226 = vld [vmem:[#allocation8 + $0x8] sm:$0xff]
    %v227 = vld [vmem:[#allocation8 + $0x10] sm:$0xff]
    %v228 = vld [vmem:[#allocation8 + $0x18] sm:$0xff]
    %v229 = vld [vmem:[#allocation8 + $0x20] sm:$0xff]
    %v230 = vld [vmem:[#allocation8 + $0x28] sm:$0xff]
    %v231 = vld [vmem:[#allocation8 + $0x30] sm:$0xff]
    %v232 = vld [vmem:[#allocation8 + $0x38] sm:$0xff]
    %v233 = vld [vmem:[#allocation8 + $0x40] sm:$0xff]
    %v234 = vld [vmem:[#allocation8 + $0x48] sm:$0xff]
    %v235 = vld [vmem:[#allocation8 + $0x50] sm:$0xff]
    %v236 = vld [vmem:[#allocation8 + $0x58] sm:$0xff]
    %v237 = vld [vmem:[#allocation8 + $0x60] sm:$0xff]
    %v238 = vld [vmem:[#allocation8 + $0x68] sm:$0xff]
    %v239 = vld [vmem:[#allocation8 + $0x70] sm:$0xff]
    %v240 = vld [vmem:[#allocation8 + $0x78] sm:$0xff]
    %v241 = vld [vmem:[#allocation8 + $0x80] sm:$0xff]
    %v242 = vld [vmem:[#allocation8 + $0x88] sm:$0xff]
    %v243 = vld [vmem:[#allocation8 + $0x90] sm:$0xff]
    %v244 = vld [vmem:[#allocation8 + $0x98] sm:$0xff]
    %v245 = vld [vmem:[#allocation8 + $0xa0] sm:$0xff]
    %v246 = vld [vmem:[#allocation8 + $0xa8] sm:$0xff]
    %v247 = vld [vmem:[#allocation8 + $0xb0] sm:$0xff]
    %v248 = vld [vmem:[#allocation8 + $0xb8] sm:$0xff]
    %v249 = vld [vmem:[#allocation8 + $0xc0] sm:$0xff]
    %v250 = vld [vmem:[#allocation8 + $0xc8] sm:$0xff]
    %v251 = vld [vmem:[#allocation8 + $0xd0] sm:$0xff]
    %v252 = vld [vmem:[#allocation8 + $0xd8] sm:$0xff]
    %v253 = vld [vmem:[#allocation8 + $0xe0] sm:$0xff]
    %v254 = vld [vmem:[#allocation8 + $0xe8] sm:$0xff]
    %v255 = vld [vmem:[#allocation8 + $0xf0] sm:$0xff]
    %v256 = vld [vmem:[#allocation8 + $0xf8] sm:$0xff]
    %v257 = vld [vmem:[#allocation8 + $0x100] sm:$0xff]
    %v258 = vld [vmem:[#allocation8 + $0x108] sm:$0xff]
    %v259 = vld [vmem:[#allocation8 + $0x110] sm:$0xff]
    %v260 = vld [vmem:[#allocation8 + $0x118] sm:$0xff]
    %v261 = vld [vmem:[#allocation8 + $0x120] sm:$0xff]
    %v262 = vld [vmem:[#allocation8 + $0x128] sm:$0xff]
    %v263 = vld [vmem:[#allocation8 + $0x130] sm:$0xff]
    %v264 = vld [vmem:[#allocation8 + $0x138] sm:$0xff]
    %v265 = vld [vmem:[#allocation8 + $0x140] sm:$0xff]
    %v266 = vld [vmem:[#allocation8 + $0x148] sm:$0xff]
    %v267 = vld [vmem:[#allocation8 + $0x150] sm:$0xff]
    %v268 = vld [vmem:[#allocation8 + $0x158] sm:$0xff]
    %v269 = vld [vmem:[#allocation8 + $0x160] sm:$0xff]
    %v270 = vld [vmem:[#allocation8 + $0x168] sm:$0xff]
    %v271 = vld [vmem:[#allocation8 + $0x170] sm:$0xff]
    %v272 = vld [vmem:[#allocation8 + $0x178] sm:$0xff]
    %v273 = vld [vmem:[#allocation8 + $0x180] sm:$0xff]
    %v274 = vld [vmem:[#allocation8 + $0x188] sm:$0xff]
    %v275 = vld [vmem:[#allocation8 + $0x190] sm:$0xff]
    %v276 = vld [vmem:[#allocation8 + $0x198] sm:$0xff]
    %v277 = vld [vmem:[#allocation8 + $0x1a0] sm:$0xff]
    %v278 = vld [vmem:[#allocation8 + $0x1a8] sm:$0xff]
    %v279 = vld [vmem:[#allocation8 + $0x1b0] sm:$0xff]
    %v280 = vld [vmem:[#allocation8 + $0x1b8] sm:$0xff]
    %v281 = vld [vmem:[#allocation8 + $0x1c0] sm:$0xff]
    %v282 = vld [vmem:[#allocation8 + $0x1c8] sm:$0xff]
    %v283 = vld [vmem:[#allocation8 + $0x1d0] sm:$0xff]
    %v284 = vld [vmem:[#allocation8 + $0x1d8] sm:$0xff]
    %v285 = vld [vmem:[#allocation8 + $0x1e0] sm:$0xff]
    %v286 = vld [vmem:[#allocation8 + $0x1e8] sm:$0xff]
    %v287 = vld [vmem:[#allocation8 + $0x1f0] sm:$0xff]
    %v288 = vld [vmem:[#allocation8 + $0x1f8] sm:$0xff]
    %v289 = vld [vmem:[#allocation8 + $0x200] sm:$0xff]
    %v290 = vld [vmem:[#allocation8 + $0x208] sm:$0xff]
    %v291 = vld [vmem:[#allocation8 + $0x210] sm:$0xff]
    %v292 = vld [vmem:[#allocation8 + $0x218] sm:$0xff]
    %v293 = vld [vmem:[#allocation8 + $0x220] sm:$0xff]
    %v294 = vld [vmem:[#allocation8 + $0x228] sm:$0xff]
    %v295 = vld [vmem:[#allocation8 + $0x230] sm:$0xff]
    %v296 = vld [vmem:[#allocation8 + $0x238] sm:$0xff]
    %v297 = vld [vmem:[#allocation8 + $0x240] sm:$0xff]
    %v298 = vld [vmem:[#allocation8 + $0x248] sm:$0xff]
    %v299 = vld [vmem:[#allocation8 + $0x250] sm:$0xff]
    %v300 = vld [vmem:[#allocation8 + $0x258] sm:$0xff]
    %v301 = vld [vmem:[#allocation8 + $0x260] sm:$0xff]
    %v302 = vld [vmem:[#allocation8 + $0x268] sm:$0xff]
    %v303 = vld [vmem:[#allocation8 + $0x270] sm:$0xff]
    %v304 = vld [vmem:[#allocation8 + $0x278] sm:$0xff]
    %v305 = vld [vmem:[#allocation8 + $0x280] sm:$0xff]
    %v306 = vld [vmem:[#allocation8 + $0x288] sm:$0xff]
    %v307 = vld [vmem:[#allocation8 + $0x290] sm:$0xff]
    %v308 = vld [vmem:[#allocation8 + $0x298] sm:$0xff]
    %v309 = vld [vmem:[#allocation8 + $0x2a0] sm:$0xff]
    %v310 = vld [vmem:[#allocation8 + $0x2a8] sm:$0xff]
    %v311 = vld [vmem:[#allocation8 + $0x2b0] sm:$0xff]
    %v312 = vld [vmem:[#allocation8 + $0x2b8] sm:$0xff]
    %v313 = vld [vmem:[#allocation8 + $0x2c0] sm:$0xff]
    %v314 = vld [vmem:[#allocation8 + $0x2c8] sm:$0xff]
    %v315 = vld [vmem:[#allocation8 + $0x2d0] sm:$0xff]
    %v316 = vld [vmem:[#allocation8 + $0x2d8] sm:$0xff]
    %v317 = vld [vmem:[#allocation8 + $0x2e0] sm:$0xff]
    %v318 = vld [vmem:[#allocation8 + $0x2e8] sm:$0xff]
    %v319 = vld [vmem:[#allocation8 + $0x2f0] sm:$0xff]
    %v320 = vld [vmem:[#allocation8 + $0x2f8] sm:$0xff]
    %v321 = vld [vmem:[#allocation8 + $0x300] sm:$0xff]
    %v322 = vld [vmem:[#allocation8 + $0x308] sm:$0xff]
    %v323 = vld [vmem:[#allocation8 + $0x310] sm:$0xff]
    %v324 = vld [vmem:[#allocation8 + $0x318] sm:$0xff]
    %v325 = vld [vmem:[#allocation8 + $0x320] sm:$0xff]
    %v326 = vld [vmem:[#allocation8 + $0x328] sm:$0xff]
    %v327 = vld [vmem:[#allocation8 + $0x330] sm:$0xff]
    %v328 = vld [vmem:[#allocation8 + $0x338] sm:$0xff]
    %v329 = vld [vmem:[#allocation8 + $0x340] sm:$0xff]
    %v330 = vld [vmem:[#allocation8 + $0x348] sm:$0xff]
    %v331 = vld [vmem:[#allocation8 + $0x350] sm:$0xff]
    %v332 = vld [vmem:[#allocation8 + $0x358] sm:$0xff]
    %v333 = vld [vmem:[#allocation8 + $0x360] sm:$0xff]
    %v334 = vld [vmem:[#allocation8 + $0x368] sm:$0xff]
    %v335 = vld [vmem:[#allocation8 + $0x370] sm:$0xff]
    %v336 = vld [vmem:[#allocation8 + $0x378] sm:$0xff]
    %v337 = vld [vmem:[#allocation8 + $0x380] sm:$0xff]
    %v338 = vld [vmem:[#allocation8 + $0x388] sm:$0xff]
    %v339 = vld [vmem:[#allocation8 + $0x390] sm:$0xff]
    %v340 = vld [vmem:[#allocation8 + $0x398] sm:$0xff]
    %v341 = vld [vmem:[#allocation8 + $0x3a0] sm:$0xff]
    %v342 = vld [vmem:[#allocation8 + $0x3a8] sm:$0xff]
    %v343 = vld [vmem:[#allocation8 + $0x3b0] sm:$0xff]
    %v344 = vld [vmem:[#allocation8 + $0x3b8] sm:$0xff]
    %v345 = vld [vmem:[#allocation8 + $0x3c0] sm:$0xff]
    %v346 = vld [vmem:[#allocation8 + $0x3c8] sm:$0xff]
    %v347 = vld [vmem:[#allocation8 + $0x3d0] sm:$0xff]
    %v348 = vld [vmem:[#allocation8 + $0x3d8] sm:$0xff]
    %v349 = vld [vmem:[#allocation8 + $0x3e0] sm:$0xff]
    %v350 = vld [vmem:[#allocation8 + $0x3e8] sm:$0xff]
    %v351 = vld [vmem:[#allocation8 + $0x3f0] sm:$0xff]
    %v352 = vld [vmem:[#allocation8 + $0x3f8] sm:$0xff]
    %v353 = vld [vmem:[%s4] sm:$0x1]
    %v355 = vlaneseq
    %v356 = vshrl.u32 %v355, 7
    %v357 = vsub.s32 0, %v356
    %v358 = vrot.slane %v353, %v357
    %360 = vmatprep.subr.mxu0 0.0
    %361 = vmatpush1.msra.mxu0 %v225
    %362 = vmatprep.subr.mxu0 0.0
    %363 = vmatpush1.msra.mxu0 %v226
    %364 = vmatprep.subr.mxu0 0.0
    %365 = vmatpush1.msra.mxu0 %v227
    %366 = vmatprep.subr.mxu0 0.0
    %367 = vmatpush1.msra.mxu0 %v228
    %368 = vmatprep.subr.mxu0 0.0
    %369 = vmatpush1.msra.mxu0 %v229
    %370 = vmatprep.subr.mxu0 0.0
    %371 = vmatpush1.msra.mxu0 %v230
    %372 = vmatprep.subr.mxu0 0.0
    %373 = vmatpush1.msra.mxu0 %v231
    %374 = vmatprep.subr.mxu0 0.0
    %375 = vmatpush1.msra.mxu0 %v232
    %376 = vmatprep.subr.mxu0 0.0
    %377 = vmatpush1.msra.mxu0 %v233
    %378 = vmatprep.subr.mxu0 0.0
    %379 = vmatpush1.msra.mxu0 %v234
    %380 = vmatprep.subr.mxu0 0.0
    %381 = vmatpush1.msra.mxu0 %v235
    %382 = vmatprep.subr.mxu0 0.0
    %383 = vmatpush1.msra.mxu0 %v236
    %384 = vmatprep.subr.mxu0 0.0
    %385 = vmatpush1.msra.mxu0 %v237
    %386 = vmatprep.subr.mxu0 0.0
    %387 = vmatpush1.msra.mxu0 %v238
    %388 = vmatprep.subr.mxu0 0.0
    %389 = vmatpush1.msra.mxu0 %v239
    %390 = vmatprep.subr.mxu0 0.0
    %391 = vmatpush1.msra.mxu0 %v240
    %392 = vmatprep.subr.mxu0 0.0
    %393 = vmatpush1.msra.mxu0 %v241
    %394 = vmatprep.subr.mxu0 0.0
    %395 = vmatpush1.msra.mxu0 %v242
    %396 = vmatprep.subr.mxu0 0.0
    %397 = vmatpush1.msra.mxu0 %v243
    %398 = vmatprep.subr.mxu0 0.0
    %399 = vmatpush1.msra.mxu0 %v244
    %400 = vmatprep.subr.mxu0 0.0
    %401 = vmatpush1.msra.mxu0 %v245
    %402 = vmatprep.subr.mxu0 0.0
    %403 = vmatpush1.msra.mxu0 %v246
    %404 = vmatprep.subr.mxu0 0.0
    %405 = vmatpush1.msra.mxu0 %v247
    %406 = vmatprep.subr.mxu0 0.0
    %407 = vmatpush1.msra.mxu0 %v248
    %408 = vmatprep.subr.mxu0 0.0
    %409 = vmatpush1.msra.mxu0 %v249
    %410 = vmatprep.subr.mxu0 0.0
    %411 = vmatpush1.msra.mxu0 %v250
    %412 = vmatprep.subr.mxu0 0.0
    %413 = vmatpush1.msra.mxu0 %v251
    %414 = vmatprep.subr.mxu0 0.0
    %415 = vmatpush1.msra.mxu0 %v252
    %416 = vmatprep.subr.mxu0 0.0
    %417 = vmatpush1.msra.mxu0 %v253
    %418 = vmatprep.subr.mxu0 0.0
    %419 = vmatpush1.msra.mxu0 %v254
    %420 = vmatprep.subr.mxu0 0.0
    %421 = vmatpush1.msra.mxu0 %v255
    %422 = vmatprep.subr.mxu0 0.0
    %423 = vmatpush1.msra.mxu0 %v256
    %424 = vmatprep.mubr.f32.mxu0 %v218
    %425 = vmatmul.mubr.f32.gmra.mrb[0].mxu0 %v217
    %v426 = vpop.f32.mrb[0].mxu0
    %v427 = vadd.f32 %v358, %v426
    %v428 = vpop.f32.mrb[0].mxu0
    %429 = vdwg.mxu0
    %430 = vmatprep.subr.mxu0 0.0
    %431 = vmatpush1.msra.mxu0 %v257
    %432 = vmatprep.subr.mxu0 0.0
    %433 = vmatpush1.msra.mxu0 %v258
    %434 = vmatprep.subr.mxu0 0.0
    %435 = vmatpush1.msra.mxu0 %v259
    %436 = vmatprep.subr.mxu0 0.0
    %437 = vmatpush1.msra.mxu0 %v260
    %438 = vmatprep.subr.mxu0 0.0
    %439 = vmatpush1.msra.mxu0 %v261
    %440 = vmatprep.subr.mxu0 0.0
    %441 = vmatpush1.msra.mxu0 %v262
    %442 = vmatprep.subr.mxu0 0.0
    %443 = vmatpush1.msra.mxu0 %v263
    %444 = vmatprep.subr.mxu0 0.0
    %445 = vmatpush1.msra.mxu0 %v264
    %446 = vmatprep.subr.mxu0 0.0
    %447 = vmatpush1.msra.mxu0 %v265
    %448 = vmatprep.subr.mxu0 0.0
    %449 = vmatpush1.msra.mxu0 %v266
    %450 = vmatprep.subr.mxu0 0.0
    %451 = vmatpush1.msra.mxu0 %v267
    %452 = vmatprep.subr.mxu0 0.0
    %453 = vmatpush1.msra.mxu0 %v268
    %454 = vmatprep.subr.mxu0 0.0
    %455 = vmatpush1.msra.mxu0 %v269
    %456 = vmatprep.subr.mxu0 0.0
    %457 = vmatpush1.msra.mxu0 %v270
    %458 = vmatprep.subr.mxu0 0.0
    %459 = vmatpush1.msra.mxu0 %v271
    %460 = vmatprep.subr.mxu0 0.0
    %461 = vmatpush1.msra.mxu0 %v272
    %462 = vmatprep.subr.mxu0 0.0
    %463 = vmatpush1.msra.mxu0 %v273
    %464 = vmatprep.subr.mxu0 0.0
    %465 = vmatpush1.msra.mxu0 %v274
    %466 = vmatprep.subr.mxu0 0.0
    %467 = vmatpush1.msra.mxu0 %v275
    %468 = vmatprep.subr.mxu0 0.0
    %469 = vmatpush1.msra.mxu0 %v276
    %470 = vmatprep.subr.mxu0 0.0
    %471 = vmatpush1.msra.mxu0 %v277
    %472 = vmatprep.subr.mxu0 0.0
    %473 = vmatpush1.msra.mxu0 %v278
    %474 = vmatprep.subr.mxu0 0.0
    %475 = vmatpush1.msra.mxu0 %v279
    %476 = vmatprep.subr.mxu0 0.0
    %477 = vmatpush1.msra.mxu0 %v280
    %478 = vmatprep.subr.mxu0 0.0
    %479 = vmatpush1.msra.mxu0 %v281
    %480 = vmatprep.subr.mxu0 0.0
    %481 = vmatpush1.msra.mxu0 %v282
    %482 = vmatprep.subr.mxu0 0.0
    %483 = vmatpush1.msra.mxu0 %v283
    %484 = vmatprep.subr.mxu0 0.0
    %485 = vmatpush1.msra.mxu0 %v284
    %486 = vmatprep.subr.mxu0 0.0
    %487 = vmatpush1.msra.mxu0 %v285
    %488 = vmatprep.subr.mxu0 0.0
    %489 = vmatpush1.msra.mxu0 %v286
    %490 = vmatprep.subr.mxu0 0.0
    %491 = vmatpush1.msra.mxu0 %v287
    %492 = vmatprep.subr.mxu0 0.0
    %493 = vmatpush1.msra.mxu0 %v288
    %494 = vmatprep.mubr.f32.mxu0 %v220
    %495 = vmatmul.mubr.f32.gmra.mrb[0].mxu0 %v219
    %v496 = vpop.f32.mrb[0].mxu0
    %v497 = vadd.f32 %v427, %v496
    %v498 = vpop.f32.mrb[0].mxu0
    %499 = vdwg.mxu0
    %500 = vmatprep.subr.mxu0 0.0
    %501 = vmatpush1.msra.mxu0 %v289
    %502 = vmatprep.subr.mxu0 0.0
    %503 = vmatpush1.msra.mxu0 %v290
    %504 = vmatprep.subr.mxu0 0.0
    %505 = vmatpush1.msra.mxu0 %v291
    %506 = vmatprep.subr.mxu0 0.0
    %507 = vmatpush1.msra.mxu0 %v292
    %508 = vmatprep.subr.mxu0 0.0
    %509 = vmatpush1.msra.mxu0 %v293
    %510 = vmatprep.subr.mxu0 0.0
    %511 = vmatpush1.msra.mxu0 %v294
    %512 = vmatprep.subr.mxu0 0.0
    %513 = vmatpush1.msra.mxu0 %v295
    %514 = vmatprep.subr.mxu0 0.0
    %515 = vmatpush1.msra.mxu0 %v296
    %516 = vmatprep.subr.mxu0 0.0
    %517 = vmatpush1.msra.mxu0 %v297
    %518 = vmatprep.subr.mxu0 0.0
    %519 = vmatpush1.msra.mxu0 %v298
    %520 = vmatprep.subr.mxu0 0.0
    %521 = vmatpush1.msra.mxu0 %v299
    %522 = vmatprep.subr.mxu0 0.0
    %523 = vmatpush1.msra.mxu0 %v300
    %524 = vmatprep.subr.mxu0 0.0
    %525 = vmatpush1.msra.mxu0 %v301
    %526 = vmatprep.subr.mxu0 0.0
    %527 = vmatpush1.msra.mxu0 %v302
    %528 = vmatprep.subr.mxu0 0.0
    %529 = vmatpush1.msra.mxu0 %v303
    %530 = vmatprep.subr.mxu0 0.0
    %531 = vmatpush1.msra.mxu0 %v304
    %532 = vmatprep.subr.mxu0 0.0
    %533 = vmatpush1.msra.mxu0 %v305
    %534 = vmatprep.subr.mxu0 0.0
    %535 = vmatpush1.msra.mxu0 %v306
    %536 = vmatprep.subr.mxu0 0.0
    %537 = vmatpush1.msra.mxu0 %v307
    %538 = vmatprep.subr.mxu0 0.0
    %539 = vmatpush1.msra.mxu0 %v308
    %540 = vmatprep.subr.mxu0 0.0
    %541 = vmatpush1.msra.mxu0 %v309
    %542 = vmatprep.subr.mxu0 0.0
    %543 = vmatpush1.msra.mxu0 %v310
    %544 = vmatprep.subr.mxu0 0.0
    %545 = vmatpush1.msra.mxu0 %v311
    %546 = vmatprep.subr.mxu0 0.0
    %547 = vmatpush1.msra.mxu0 %v312
    %548 = vmatprep.subr.mxu0 0.0
    %549 = vmatpush1.msra.mxu0 %v313
    %550 = vmatprep.subr.mxu0 0.0
    %551 = vmatpush1.msra.mxu0 %v314
    %552 = vmatprep.subr.mxu0 0.0
    %553 = vmatpush1.msra.mxu0 %v315
    %554 = vmatprep.subr.mxu0 0.0
    %555 = vmatpush1.msra.mxu0 %v316
    %556 = vmatprep.subr.mxu0 0.0
    %557 = vmatpush1.msra.mxu0 %v317
    %558 = vmatprep.subr.mxu0 0.0
    %559 = vmatpush1.msra.mxu0 %v318
    %560 = vmatprep.subr.mxu0 0.0
    %561 = vmatpush1.msra.mxu0 %v319
    %562 = vmatprep.subr.mxu0 0.0
    %563 = vmatpush1.msra.mxu0 %v320
    %564 = vmatprep.mubr.f32.mxu0 %v222
    %565 = vmatmul.mubr.f32.gmra.mrb[0].mxu0 %v221
    %v566 = vpop.f32.mrb[0].mxu0
    %v567 = vadd.f32 %v497, %v566
    %v568 = vpop.f32.mrb[0].mxu0
    %569 = vdwg.mxu0
    %570 = vmatprep.subr.mxu0 0.0
    %571 = vmatpush1.msra.mxu0 %v321
    %572 = vmatprep.subr.mxu0 0.0
    %573 = vmatpush1.msra.mxu0 %v322
    %574 = vmatprep.subr.mxu0 0.0
    %575 = vmatpush1.msra.mxu0 %v323
    %576 = vmatprep.subr.mxu0 0.0
    %577 = vmatpush1.msra.mxu0 %v324
    %578 = vmatprep.subr.mxu0 0.0
    %579 = vmatpush1.msra.mxu0 %v325
    %580 = vmatprep.subr.mxu0 0.0
    %581 = vmatpush1.msra.mxu0 %v326
    %582 = vmatprep.subr.mxu0 0.0
    %583 = vmatpush1.msra.mxu0 %v327
    %584 = vmatprep.subr.mxu0 0.0
    %585 = vmatpush1.msra.mxu0 %v328
    %586 = vmatprep.subr.mxu0 0.0
    %587 = vmatpush1.msra.mxu0 %v329
    %588 = vmatprep.subr.mxu0 0.0
    %589 = vmatpush1.msra.mxu0 %v330
    %590 = vmatprep.subr.mxu0 0.0
    %591 = vmatpush1.msra.mxu0 %v331
    %592 = vmatprep.subr.mxu0 0.0
    %593 = vmatpush1.msra.mxu0 %v332
    %594 = vmatprep.subr.mxu0 0.0
    %595 = vmatpush1.msra.mxu0 %v333
    %596 = vmatprep.subr.mxu0 0.0
    %597 = vmatpush1.msra.mxu0 %v334
    %598 = vmatprep.subr.mxu0 0.0
    %599 = vmatpush1.msra.mxu0 %v335
    %600 = vmatprep.subr.mxu0 0.0
    %601 = vmatpush1.msra.mxu0 %v336
    %602 = vmatprep.subr.mxu0 0.0
    %603 = vmatpush1.msra.mxu0 %v337
    %604 = vmatprep.subr.mxu0 0.0
    %605 = vmatpush1.msra.mxu0 %v338
    %606 = vmatprep.subr.mxu0 0.0
    %607 = vmatpush1.msra.mxu0 %v339
    %608 = vmatprep.subr.mxu0 0.0
    %609 = vmatpush1.msra.mxu0 %v340
    %610 = vmatprep.subr.mxu0 0.0
    %611 = vmatpush1.msra.mxu0 %v341
    %612 = vmatprep.subr.mxu0 0.0
    %613 = vmatpush1.msra.mxu0 %v342
    %614 = vmatprep.subr.mxu0 0.0
    %615 = vmatpush1.msra.mxu0 %v343
    %616 = vmatprep.subr.mxu0 0.0
    %617 = vmatpush1.msra.mxu0 %v344
    %618 = vmatprep.subr.mxu0 0.0
    %619 = vmatpush1.msra.mxu0 %v345
    %620 = vmatprep.subr.mxu0 0.0
    %621 = vmatpush1.msra.mxu0 %v346
    %622 = vmatprep.subr.mxu0 0.0
    %623 = vmatpush1.msra.mxu0 %v347
    %624 = vmatprep.subr.mxu0 0.0
    %625 = vmatpush1.msra.mxu0 %v348
    %626 = vmatprep.subr.mxu0 0.0
    %627 = vmatpush1.msra.mxu0 %v349
    %628 = vmatprep.subr.mxu0 0.0
    %629 = vmatpush1.msra.mxu0 %v350
    %630 = vmatprep.subr.mxu0 0.0
    %631 = vmatpush1.msra.mxu0 %v351
    %632 = vmatprep.subr.mxu0 0.0
    %633 = vmatpush1.msra.mxu0 %v352
    %634 = vmatprep.mubr.f32.mxu0 %v224
    %635 = vmatmul.mubr.f32.gmra.mrb[0].mxu0 %v223
    %v636 = vpop.f32.mrb[0].mxu0
    %v637 = vadd.f32 %v567, %v636
    %v638 = vpop.f32.mrb[0].mxu0
    %639 = vdwg.mxu0
    %640 = vst [vmem:[#allocation10] sm:$0xff] %v637
    // Predicated region
    $region38: #{tpu_custom_call.1} parent=1 // pred_check
      _
    $region39: #{tpu_custom_call.1} parent=1 // pred_check_branch
      %642 = sbr.rel (0) target = $region41
    $region40: #{tpu_custom_call.1} parent=1 // pred_region
      %s644 = ssub.s32 128, 128
      %645 = vsyncadd [#allocation4], %s644
      %s647 = sshll.u32 [#allocation10], 4
      %s648 = int_to_ptr.vmem [resolvable:$true] %s647
      %650 = dma.vmem_to_hbm [thread:$0]  %s648, 128, %s5, [#allocation4]
    $region41: #{tpu_custom_call.1} parent=1 // pred_fallthru
      _
    // Predicated region
    $region42: #{tpu_custom_call.1} parent=1 // pred_check
      _
    $region43: #{tpu_custom_call.1} parent=1 // pred_check_branch
      %652 = sbr.rel (0) target = $region45
    $region44: #{tpu_custom_call.1} parent=1 // pred_region
      %653 = dma.done [#allocation4], 128
    $region45: #{tpu_custom_call.1} parent=1 // pred_fallthru
      _
    %654 = vsyncpa [#allocation3], 1
    %655 = vsyncpa [#allocation6], 1
    %656 = vsyncpa [#allocation9], 1
    %657 = vsyncpa [#allocation4], 1

</llo_original>
